<compile_context>
chip_gen: v7x
topology: tpu7x:2x2x1
jax: 0.10.0
libtpu: 0.0.40
codegen_flags: <defaults>
</compile_context>

<pallas_src>
from functools import partial

import jax
import jax.numpy as jnp
from jax.experimental import pallas as pl
from jax.experimental.pallas import tpu as pltpu


# ----------------------------------------------------------------------------
# Kernels
# ----------------------------------------------------------------------------
def _stats_kernel(x_ref, sum_ref, sumsq_ref):
    """Single-pass per-channel sum / sum-of-squares reduction.

    x_ref:     (1, C, T) input tile
    sum_ref:   (C, 1)    accumulator (resident across the whole grid)
    sumsq_ref: (C, 1)    accumulator (resident across the whole grid)
    """
    @pl.when((pl.program_id(0) == 0) & (pl.program_id(1) == 0))
    def _():
        sum_ref[...] = jnp.zeros_like(sum_ref)
        sumsq_ref[...] = jnp.zeros_like(sumsq_ref)

    x = x_ref[0].astype(jnp.float32)                  # (C, T)
    sum_ref[...] += jnp.sum(x, axis=1, keepdims=True)
    sumsq_ref[...] += jnp.sum(x * x, axis=1, keepdims=True)


def _apply_kernel(scale_ref, loc_ref, x_ref, out_ref):
    """out = scale * (x + loc), per-channel scale/loc broadcast over lanes.

    scale_ref: (C, 1)     = exp(logscale * factor)   (precomputed host-side)
    loc_ref:   (C, 1)
    x_ref:     (1, C, T)
    out_ref:   (1, C, T)
    """
    out_ref[...] = scale_ref[...] * (x_ref[...] + loc_ref[...])


# ----------------------------------------------------------------------------
# pallas_call wrappers
# ----------------------------------------------------------------------------
_VMEM_LIMIT = 32 * 1024 * 1024  # safe scoped-VMEM budget on v5e/v6e/v7x


def _pick_tile(hw, max_lanes=2048):
    """Largest multiple of 128 that divides hw (<= max_lanes); else hw."""
    best = None
    cand = 128
    while cand <= min(hw, max_lanes):
        if hw % cand == 0:
            best = cand
        cand += 128
    return best if best is not None else hw


def actnorm_stats(x3d, tile):
    """Per-channel sum and sum-of-squares over (N, HW)."""
    N, C, HW = x3d.shape
    grid = (N, HW // tile)
    return pl.pallas_call(
        _stats_kernel,
        out_shape=(
            jax.ShapeDtypeStruct((C, 1), jnp.float32),   # sum
            jax.ShapeDtypeStruct((C, 1), jnp.float32),   # sum of squares
        ),
        grid_spec=pltpu.PrefetchScalarGridSpec(
            num_scalar_prefetch=0,
            grid=grid,
            in_specs=[pl.BlockSpec((1, C, tile), lambda n, t: (n, 0, t))],
            out_specs=(
                pl.BlockSpec((C, 1), lambda n, t: (0, 0)),
                pl.BlockSpec((C, 1), lambda n, t: (0, 0)),
            ),
        ),
        compiler_params=pltpu.CompilerParams(
            dimension_semantics=("arbitrary", "arbitrary"),
            vmem_limit_bytes=_VMEM_LIMIT,
        ),
    )(x3d)


def actnorm_apply(x3d, scale, loc, tile):
    """out = scale * (x + loc), tiled over (N, HW)."""
    N, C, HW = x3d.shape
    grid = (N, HW // tile)
    return pl.pallas_call(
        _apply_kernel,
        out_shape=jax.ShapeDtypeStruct((N, C, HW), x3d.dtype),
        grid_spec=pltpu.PrefetchScalarGridSpec(
            num_scalar_prefetch=0,
            grid=grid,
            in_specs=[
                pl.BlockSpec((C, 1), lambda n, t: (0, 0)),        # scale
                pl.BlockSpec((C, 1), lambda n, t: (0, 0)),        # loc
                pl.BlockSpec((1, C, tile), lambda n, t: (n, 0, t)),
            ],
            out_specs=pl.BlockSpec((1, C, tile), lambda n, t: (n, 0, t)),
        ),
        compiler_params=pltpu.CompilerParams(
            dimension_semantics=("parallel", "parallel"),
            vmem_limit_bytes=_VMEM_LIMIT,
        ),
    )(scale, loc, x3d)


# ----------------------------------------------------------------------------
# Module-equivalent wrapper
# ----------------------------------------------------------------------------
class ActNorm:
    def __init__(self, in_channel, logdet=True, logscale_factor=3.0, ddi=True,
                 key=jax.random.PRNGKey(0)):
        self.in_channel = in_channel
        self.logdet = logdet
        self.logscale_factor = logscale_factor
        self.ddi = ddi
        # xavier_uniform_ on a (1, C, 1, 1) tensor: fan_in = C, fan_out = 1
        a = (6.0 / (in_channel + 1)) ** 0.5
        k1, k2 = jax.random.split(key)
        self.loc = jax.random.uniform(k1, (1, in_channel, 1, 1),
                                      jnp.float32, -a, a)
        self.logscale = jax.random.uniform(k2, (1, in_channel, 1, 1),
                                           jnp.float32, -a, a)
        self.initialized = False  # mirrors the 'initialized' uint8 buffer
        # TODO(synk): the DDI parameter mutation / initialized flag is eager
        # Python state and is not jit/vmap-safe (same as the original module).

    def __call__(self, x):
        # x: NCHW
        N, C, H, W = x.shape
        HW = H * W
        x3d = x.reshape(N, C, HW)          # free view, no transpose
        tile = _pick_tile(HW)
        factor = self.logscale_factor

        if (not self.initialized) and self.ddi:
            sums, sumsq = actnorm_stats(x3d, tile)
            count = float(N * HW)
            mean = sums / count                                  # (C, 1)
            var = jnp.maximum(sumsq / count - mean * mean, 0.0)  # (C, 1)
            std = jnp.sqrt(var)
            self.loc = (-mean).reshape(1, C, 1, 1)
            self.logscale = (jnp.log(1.0 / (std + 1e-6)) / factor
                             ).reshape(1, C, 1, 1)
            self.initialized = True

        # Tiny per-channel math + logdet done host-side (C elements only).
        logs = self.logscale.reshape(C, 1) * factor              # (C, 1)
        scale = jnp.exp(logs)                                    # (C, 1)
        loc = self.loc.reshape(C, 1)                             # (C, 1)
        logdet = HW * jnp.sum(logs)

        out3d = actnorm_apply(x3d, scale, loc, tile)
        out = out3d.reshape(N, C, H, W)
        if self.logdet:
            return out, logdet
        return out


# ----------------------------------------------------------------------------
# Pure-JAX reference (mirrors the PyTorch forward semantics)
# ----------------------------------------------------------------------------
def _ref_forward(x, loc, logscale, initialized, ddi, factor):
    N, C, H, W = x.shape
    if (not initialized) and ddi:
        flat = jnp.transpose(x, (1, 0, 2, 3)).reshape(C, -1)
        mean = flat.mean(axis=1)
        std = jnp.sqrt(((flat - mean[:, None]) ** 2).mean(axis=1))
        loc = (-mean).reshape(1, C, 1, 1)
        logscale = (jnp.log(1.0 / (std + 1e-6)) / factor).reshape(1, C, 1, 1)
    logs = logscale * factor
    logdet = H * W * jnp.sum(logs)
    out = jnp.exp(logs) * (x + loc)
    return out, logdet, loc, logscale


if __name__ == "__main__":
    key = jax.random.PRNGKey(0)
    kx, kp = jax.random.split(key)

    N, C, H, W = 2, 4, 16, 16
    x = jax.random.normal(kx, (N, C, H, W), jnp.float32) * 1.7 + 0.3

    model = ActNorm(C, logdet=True, logscale_factor=3.0, ddi=True, key=kp)

    # First call: data-dependent initialization path.
    out1, logdet1 = model(x)
    out1 = jax.block_until_ready(out1)
    logdet1 = jax.block_until_ready(logdet1)

    ref_out1, ref_logdet1, ref_loc, ref_logscale = _ref_forward(
        x, None, None, initialized=False, ddi=True, factor=3.0)
    assert jnp.allclose(out1, ref_out1, atol=1e-4, rtol=1e-4)
    assert jnp.allclose(logdet1, ref_logdet1, atol=1e-3, rtol=1e-4)
    assert jnp.allclose(model.loc, ref_loc, atol=1e-5, rtol=1e-5)
    assert jnp.allclose(model.logscale, ref_logscale, atol=1e-5, rtol=1e-5)

    # Second call: standard parameterized forward path.
    out2, logdet2 = model(x)
    out2 = jax.block_until_ready(out2)
    logdet2 = jax.block_until_ready(logdet2)

    ref_out2, ref_logdet2, _, _ = _ref_forward(
        x, model.loc, model.logscale, initialized=True, ddi=True, factor=3.0)
    assert jnp.allclose(out2, ref_out2, atol=1e-4, rtol=1e-4)
    assert jnp.allclose(logdet2, ref_logdet2, atol=1e-3, rtol=1e-4)

    print("KERNEL_OK")
</pallas_src>

<mosaic_0001>
module attributes {stable_mosaic.version = 11 : i64} {
  func.func @_stats_kernel(%arg0: i32, %arg1: i32, %arg2: memref<1x4x256xf32, #tpu.memory_space<vmem>>, %arg3: memref<4x1xf32, #tpu.memory_space<vmem>>, %arg4: memref<4x1xf32, #tpu.memory_space<vmem>>) attributes {dimension_semantics = [#tpu.dimension_semantics<arbitrary>, #tpu.dimension_semantics<arbitrary>], iteration_bounds = array<i64: 2, 1>, scalar_prefetch = 0 : i64, scratch_operands = 0 : i64, tpu.core_type = #tpu.core_type<tc>, window_params = [{transform_indices = @transform_0, window_bounds = array<i64: 1, 4, 256>}, {pipeline_mode = #tpu.pipeline_mode<synchronous>, transform_indices = @transform_1, window_bounds = array<i64: 4, 1>}, {pipeline_mode = #tpu.pipeline_mode<synchronous>, transform_indices = @transform_2, window_bounds = array<i64: 4, 1>}]} {
    %c0_i32 = arith.constant 0 : i32
    %0 = arith.cmpi eq, %arg0, %c0_i32 : i32
    %c0_i32_0 = arith.constant 0 : i32
    %1 = arith.cmpi eq, %arg1, %c0_i32_0 : i32
    %2 = arith.andi %0, %1 : i1
    %3 = arith.extui %2 : i1 to i32
    %c0_i32_1 = arith.constant 0 : i32
    %4 = arith.cmpi ne, %3, %c0_i32_1 : i32
    scf.if %4 {
      %cst_13 = arith.constant 0.000000e+00 : f32
      %18 = vector.broadcast %cst_13 : f32 to vector<4x1xf32>
      %c0_14 = arith.constant 0 : index
      %c0_15 = arith.constant 0 : index
      %19 = vector.load %arg3[%c0_14, %c0_15] : memref<4x1xf32, #tpu.memory_space<vmem>>, vector<4x1xf32>
      tpu.vector_store %arg3[%c0_14, %c0_15], %18 {strides = array<i32>} : memref<4x1xf32, #tpu.memory_space<vmem>>, vector<4x1xf32>,
      %cst_16 = arith.constant 0.000000e+00 : f32
      %20 = vector.broadcast %cst_16 : f32 to vector<4x1xf32>
      %c0_17 = arith.constant 0 : index
      %c0_18 = arith.constant 0 : index
      %21 = vector.load %arg4[%c0_17, %c0_18] : memref<4x1xf32, #tpu.memory_space<vmem>>, vector<4x1xf32>
      tpu.vector_store %arg4[%c0_17, %c0_18], %20 {strides = array<i32>} : memref<4x1xf32, #tpu.memory_space<vmem>>, vector<4x1xf32>,
    } else {
    }
    %c0 = arith.constant 0 : index
    %c0_2 = arith.constant 0 : index
    %c0_3 = arith.constant 0 : index
    %5 = vector.load %arg2[%c0, %c0_2, %c0_3] : memref<1x4x256xf32, #tpu.memory_space<vmem>>, vector<1x4x256xf32>
    %6 = vector.shape_cast %5 : vector<1x4x256xf32> to vector<4x256xf32>
    %c0_4 = arith.constant 0 : index
    %c0_5 = arith.constant 0 : index
    %7 = vector.load %arg3[%c0_4, %c0_5] : memref<4x1xf32, #tpu.memory_space<vmem>>, vector<4x1xf32>
    %cst = arith.constant dense<0.000000e+00> : vector<4xf32>
    %8 = vector.multi_reduction <add>, %6, %cst [1] : vector<4x256xf32> to vector<4xf32>
    %9 = vector.shape_cast %8 : vector<4xf32> to vector<4x1xf32>
    %10 = arith.addf %7, %9 : vector<4x1xf32>
    %c0_6 = arith.constant 0 : index
    %c0_7 = arith.constant 0 : index
    %11 = vector.load %arg3[%c0_6, %c0_7] : memref<4x1xf32, #tpu.memory_space<vmem>>, vector<4x1xf32>
    tpu.vector_store %arg3[%c0_6, %c0_7], %10 {strides = array<i32>} : memref<4x1xf32, #tpu.memory_space<vmem>>, vector<4x1xf32>,
    %c0_8 = arith.constant 0 : index
    %c0_9 = arith.constant 0 : index
    %12 = vector.load %arg4[%c0_8, %c0_9] : memref<4x1xf32, #tpu.memory_space<vmem>>, vector<4x1xf32>
    %13 = arith.mulf %6, %6 : vector<4x256xf32>
    %cst_10 = arith.constant dense<0.000000e+00> : vector<4xf32>
    %14 = vector.multi_reduction <add>, %13, %cst_10 [1] : vector<4x256xf32> to vector<4xf32>
    %15 = vector.shape_cast %14 : vector<4xf32> to vector<4x1xf32>
    %16 = arith.addf %12, %15 : vector<4x1xf32>
    %c0_11 = arith.constant 0 : index
    %c0_12 = arith.constant 0 : index
    %17 = vector.load %arg4[%c0_11, %c0_12] : memref<4x1xf32, #tpu.memory_space<vmem>>, vector<4x1xf32>
    tpu.vector_store %arg4[%c0_11, %c0_12], %16 {strides = array<i32>} : memref<4x1xf32, #tpu.memory_space<vmem>>, vector<4x1xf32>,
    return
  }
  func.func @transform_0(%arg0: i32, %arg1: i32) -> (i32, i32, i32) {
    %c0_i32 = arith.constant 0 : i32
    %c0_i32_0 = arith.constant 0 : i32
    return %arg0, %c0_i32, %arg1 : i32, i32, i32
  }
  func.func @transform_1(%arg0: i32, %arg1: i32) -> (i32, i32) {
    %c0_i32 = arith.constant 0 : i32
    %c0_i32_0 = arith.constant 0 : i32
    %c0_i32_1 = arith.constant 0 : i32
    return %c0_i32, %c0_i32_0 : i32, i32
  }
  func.func @transform_2(%arg0: i32, %arg1: i32) -> (i32, i32) {
    %c0_i32 = arith.constant 0 : i32
    %c0_i32_0 = arith.constant 0 : i32
    %c0_i32_1 = arith.constant 0 : i32
    return %c0_i32, %c0_i32_0 : i32, i32
  }
}

</mosaic_0001>

<llo_original>
// kernel: tpu_custom_call.1
$region0: #{tpu_custom_call.1}
  #allocation0 [shape = 'u32[]', space=smem, size = 0x4, offset = 0x4, fixed_abs, tag = 'smem constant byte address 0x4 - core index']
  #allocation1 [shape = 'u32[144,128]{1,0:T(1,128)}', space=vmem, size = 0x12000, scoped, tag = 'internal scratch']
  %s0 = inlined_call_operand.hbm [shape: f32[2,4,256], index: 0, kind: input, shape index: {}]
  %s1 = inlined_call_operand.vmem [shape: f32[4,1], index: 1, kind: output, shape index: {0}]
  %s2 = inlined_call_operand.vmem [shape: f32[4,1], index: 2, kind: output, shape index: {1}]
  %3 = xla_tuple %s1, %s2
  %s4 = sld [smem:[#allocation0]]
  $region53: #{tpu_custom_call.1} parent=0
    _
  %s6 = ssub.s32 1, %s4
  %s7 = scalar_select 0, %s6, %s4
  $region1: #{tpu_custom_call.1} parent=0
    #allocation2 [shape = 'u8[8192]{0}', space=vmem, size = 0x2000, scoped, tag = 'input window, operand 0']
    #allocation3 [shape = 's32[2]{0}', space=sflag, size = 0x8, scoped, tag = 'scoped memory for tpu_custom_call.1']
    %8 = vsyncpa [#allocation3], 0
    %s9 = scalar_lea.sflag [#allocation3], 1
    %10 = vsyncpa %s9, 0
    loop: start=0, step=1, limit=4
    $region2: #{tpu_custom_call.1} parent=1 // loop_pre_header
      _
    $region3: #{tpu_custom_call.1} parent=1 // loop_header
      %s12 = sphi 0, %s16
      %p13 = scmp.ge.s32.totalorder %s12, 4
      %s19 = sphi 0, %s31
      %s20 = sphi 0, %s27
      %s21 = sphi 0, %s19
      %s22 = sphi 0, %s20
      %s23 = sphi 0, %s21
      %s24 = sphi 0, %s22
      %s36 = sphi 0, %s38
      %s39 = sphi 0, %s36
      %s40 = sphi 0, %s39
      %s56 = sphi 0, %s40
      %s60 = sphi 0, %s60
      %s62 = sphi 0, %s60
      %s63 = sphi 0, %s62
      %s77 = sphi 0, %s63
      %s81 = sphi 0, %s81
      %s83 = sphi 0, %s81
      %s84 = sphi 0, %s83
      %s98 = sphi 0, %s84
    $region4: #{tpu_custom_call.1} parent=1 // loop_header_branch
      %15 = sbr.rel (%p13) target = $region8
    $region5: #{tpu_custom_call.1} parent=1 // loop_body
      %s17 = ssub.s32 %s12, 1
      %s18 = ssub.s32 %s12, 2
      %s25 = sadd.s32 1, %s20
      %p26 = scmp.ge.s32.totalorder %s25, 1
      %s27 = scalar_select %p26, 0, %s25
      %s28 = sadd.s32 1, %s19
      %s29 = scalar_select %p26, %s28, %s19
      %p30 = scmp.ge.s32.totalorder %s29, 2
      %s31 = scalar_select %p30, 0, %s29
      %s32 = ssub.s32 %s19, %s31
      %s33 = ssub.s32 %s20, %s27
      %s34 = sor.u32 %s32, %s33
      %p35 = scmp.eq.s32.totalorder %s34, 0
      %s37 = sadd.s32 %s36, 1
      %s38 = scalar_select %p35, %s36, %s37
      %p41 = pneg %p35
      %p42 = scmp.eq.s32.totalorder %s12, 1
      %p43 = por %p41, %p42
      %p44 = scmp.ne.s32.totalorder %s36, %s39
      %p45 = scmp.eq.s32.totalorder %s12, 0
      %p46 = por %p44, %p45
      %p47 = scmp.ne.s32.totalorder %s36, %s39
      %p48 = scmp.eq.s32.totalorder %s17, 1
      %p49 = por %p47, %p48
      %p50 = scmp.ne.s32.totalorder %s39, %s40
      %p51 = scmp.eq.s32.totalorder %s17, 0
      %p52 = por %p50, %p51
      %p53 = scmp.ne.s32.totalorder %s39, %s40
      %p54 = scmp.eq.s32.totalorder %s18, 1
      %p55 = por %p53, %p54
      %p57 = scmp.ne.s32.totalorder %s40, %s56
      %p58 = scmp.eq.s32.totalorder %s18, 0
      %p59 = por %p57, %p58
      %s61 = sadd.s32 %s60, 1
      %p64 = scmp.eq.s32.totalorder %s12, 1
      %p65 = scmp.ne.s32.totalorder %s60, %s62
      %p66 = scmp.eq.s32.totalorder %s12, 0
      %p67 = por %p65, %p66
      %p68 = scmp.ne.s32.totalorder %s60, %s62
      %p69 = scmp.eq.s32.totalorder %s17, 1
      %p70 = por %p68, %p69
      %p71 = scmp.ne.s32.totalorder %s62, %s63
      %p72 = scmp.eq.s32.totalorder %s17, 0
      %p73 = por %p71, %p72
      %p74 = scmp.ne.s32.totalorder %s62, %s63
      %p75 = scmp.eq.s32.totalorder %s18, 1
      %p76 = por %p74, %p75
      %p78 = scmp.ne.s32.totalorder %s63, %s77
      %p79 = scmp.eq.s32.totalorder %s18, 0
      %p80 = por %p78, %p79
      %s82 = sadd.s32 %s81, 1
      %p85 = scmp.eq.s32.totalorder %s12, 1
      %p86 = scmp.ne.s32.totalorder %s81, %s83
      %p87 = scmp.eq.s32.totalorder %s12, 0
      %p88 = por %p86, %p87
      %p89 = scmp.ne.s32.totalorder %s81, %s83
      %p90 = scmp.eq.s32.totalorder %s17, 1
      %p91 = por %p89, %p90
      %p92 = scmp.ne.s32.totalorder %s83, %s84
      %p93 = scmp.eq.s32.totalorder %s17, 0
      %p94 = por %p92, %p93
      %p95 = scmp.ne.s32.totalorder %s83, %s84
      %p96 = scmp.eq.s32.totalorder %s18, 1
      %p97 = por %p95, %p96
      %p99 = scmp.ne.s32.totalorder %s84, %s98
      %p100 = scmp.eq.s32.totalorder %s18, 0
      %p101 = por %p99, %p100
      %p102 = scmp.le.s32.totalorder 1, %s12
      %p103 = scmp.lt.s32.totalorder %s12, 3
      %p104 = pnand %p102, %p103
      %p105 = pneg %p104
      // Predicated region
      $region9: #{tpu_custom_call.1} parent=5 // pred_check
        _
      $region10: #{tpu_custom_call.1} parent=5 // pred_check_branch
        %107 = sbr.rel (%p104) target = $region12
      $region11: #{tpu_custom_call.1} parent=5 // pred_region
        %s108 = ssub.s32 %s12, 1
      $region12: #{tpu_custom_call.1} parent=5 // pred_fallthru
        _
      %p109 = scmp.lt.s32.totalorder %s12, 2
      // Predicated region
      $region13: #{tpu_custom_call.1} parent=5 // pred_check
        %p110 = pneg %p109
      $region14: #{tpu_custom_call.1} parent=5 // pred_check_branch
        %112 = sbr.rel (%p110) target = $region16
      $region15: #{tpu_custom_call.1} parent=5 // pred_region
        // Predicated region
        $region17: #{tpu_custom_call.1} parent=15 // pred_check
          %p113 = pneg %p46
        $region18: #{tpu_custom_call.1} parent=15 // pred_check_branch
          %115 = sbr.rel (%p113) target = $region20
        $region19: #{tpu_custom_call.1} parent=15 // pred_region
          %s116 = sand.u32 %s36, 1
          %s117 = scalar_lea.sflag [#allocation3], %s116
          %s118 = sand.u32 %s36, 1
          %s119 = smul.addr %s118, 8
          %s120 = scalar_lea.vmem [#allocation2], %s119
          %s121 = smul.u32 2, %s20
          %s123 = ssub.s32 128, 128
          %124 = vsyncadd %s117, %s123
          %s125 = smul.addr %s19, 2
          %s126 = sadd.s32 %s121, %s125
          %s127 = smul.addr %s126, 64
          %s128 = scalar_lea.hbm %s0, %s127
          %s130 = sshll.u32 %s120, 4
          %s131 = int_to_ptr.vmem [resolvable:$true] %s130
          %133 = dma.hbm_to_vmem [thread:$0]  %s128, 128, %s131, %s117
        $region20: #{tpu_custom_call.1} parent=15 // pred_fallthru
          _
      $region16: #{tpu_custom_call.1} parent=5 // pred_fallthru
        _
      %p134 = scmp.le.s32.totalorder 1, %s12
      %p135 = scmp.lt.s32.totalorder %s12, 3
      %p136 = pnand %p134, %p135
      %p137 = pneg %p136
      // Predicated region
      $region21: #{tpu_custom_call.1} parent=5 // pred_check
        _
      $region22: #{tpu_custom_call.1} parent=5 // pred_check_branch
        %139 = sbr.rel (%p136) target = $region24
      $region23: #{tpu_custom_call.1} parent=5 // pred_region
        %s140 = ssub.s32 %s12, 1
        %s141 = sand.u32 %s39, 1
        %s142 = scalar_lea.sflag [#allocation3], %s141
        %s143 = sand.u32 %s39, 1
        %s144 = smul.addr %s143, 8
        %s145 = scalar_lea.vmem [#allocation2], %s144
        // Predicated region
        $region25: #{tpu_custom_call.1} parent=23 // pred_check
          %p146 = pneg %p52
        $region26: #{tpu_custom_call.1} parent=23 // pred_check_branch
          %148 = sbr.rel (%p146) target = $region28
        $region27: #{tpu_custom_call.1} parent=23 // pred_region
          %149 = dma.done %s142, 128
        $region28: #{tpu_custom_call.1} parent=23 // pred_fallthru
          _
        %s150 = sand.u32 %s39, 1
        %s151 = scalar_lea.sflag [#allocation3], %s150
        %s152 = sand.u32 %s39, 1
        %s153 = smul.addr %s152, 8
        %s154 = scalar_lea.vmem [#allocation2], %s153
        %p155 = pneg %p52
        %p156 = pneg %p49
        %p157 = pneg %p73
        %p158 = pneg %p70
        %p159 = pneg %p94
        %p160 = pneg %p91
        %s161 = smul.u32 2, %s22
        %p162 = scmp.eq.s32.totalorder %s21, 0
        %p163 = scmp.eq.s32.totalorder %s22, 0
        %p164 = pnand %p162, %p163
        %p165 = pneg %p164
        // Predicated region
        $region29: #{tpu_custom_call.1} parent=23 // pred_check
          _
        $region30: #{tpu_custom_call.1} parent=23 // pred_check_branch
          %167 = sbr.rel (%p164) target = $region32
        $region31: #{tpu_custom_call.1} parent=23 // pred_region
          %vm168 = vcmask 3072
          %169 = vst.msk [vmem:[%s1] sm:$0xf] %vm168, 0.0
          %170 = vst.msk [vmem:[%s2] sm:$0xf] %vm168, 0.0
        $region32: #{tpu_custom_call.1} parent=23 // pred_fallthru
          _
        %v171 = vld [vmem:[%s145] sm:$0xff]
        %v172 = vld [vmem:[%s1] sm:$0xf]
        %v174 = vcombine.high %v171, %v171
        %vm176 = vcmask 1043456
        %v177 = vsel %vm176, %v171, 0.0
        %v178 = vsel %vm176, %v174, 0.0
        %v179 = vadd.f32 %v177, %v178
        %180 = vadd.xlane.f32.xlu0 %v179
        %v181 = vpop.xlane.xlu0 %180
        %v182 = vadd.f32 %v172, %v181
        %vm183 = vcmask 3072
        %184 = vst.msk [vmem:[%s1] sm:$0xf] %vm183, %v182
        %v185 = vld [vmem:[%s2] sm:$0xf]
        %v186 = vmul.f32 %v171, %v171
        %v188 = vcombine.high %v186, %v186
        %v190 = vsel %vm176, %v186, 0.0
        %v191 = vsel %vm176, %v188, 0.0
        %v192 = vadd.f32 %v190, %v191
        %193 = vadd.xlane.f32.xlu0 %v192
        %v194 = vpop.xlane.xlu0 %193
        %v195 = vadd.f32 %v185, %v194
        %196 = vst.msk [vmem:[%s2] sm:$0xf] %vm183, %v195
        // Predicated region
        $region33: #{tpu_custom_call.1} parent=23 // pred_check
          %p197 = pneg %p70
        $region34: #{tpu_custom_call.1} parent=23 // pred_check_branch
          %199 = sbr.rel (%p197) target = $region36
        $region35: #{tpu_custom_call.1} parent=23 // pred_region
          _
        $region36: #{tpu_custom_call.1} parent=23 // pred_fallthru
          _
        // Predicated region
        $region37: #{tpu_custom_call.1} parent=23 // pred_check
          %p200 = pneg %p91
        $region38: #{tpu_custom_call.1} parent=23 // pred_check_branch
          %202 = sbr.rel (%p200) target = $region40
        $region39: #{tpu_custom_call.1} parent=23 // pred_region
          _
        $region40: #{tpu_custom_call.1} parent=23 // pred_fallthru
          _
        // Predicated region
        $region41: #{tpu_custom_call.1} parent=23 // pred_check
          %p203 = pneg %p70
        $region42: #{tpu_custom_call.1} parent=23 // pred_check_branch
          %205 = sbr.rel (%p203) target = $region44
        $region43: #{tpu_custom_call.1} parent=23 // pred_region
          _
        $region44: #{tpu_custom_call.1} parent=23 // pred_fallthru
          _
        // Predicated region
        $region45: #{tpu_custom_call.1} parent=23 // pred_check
          %p206 = pneg %p91
        $region46: #{tpu_custom_call.1} parent=23 // pred_check_branch
          %208 = sbr.rel (%p206) target = $region48
        $region47: #{tpu_custom_call.1} parent=23 // pred_region
          _
        $region48: #{tpu_custom_call.1} parent=23 // pred_fallthru
          _
      $region24: #{tpu_custom_call.1} parent=5 // pred_fallthru
        _
      %p209 = scmp.le.s32.totalorder 2, %s12
      // Predicated region
      $region49: #{tpu_custom_call.1} parent=5 // pred_check
        %p210 = pneg %p209
      $region50: #{tpu_custom_call.1} parent=5 // pred_check_branch
        %212 = sbr.rel (%p210) target = $region52
      $region51: #{tpu_custom_call.1} parent=5 // pred_region
        %s213 = ssub.s32 %s12, 2
      $region52: #{tpu_custom_call.1} parent=5 // pred_fallthru
        _
    $region6: #{tpu_custom_call.1} parent=1 // loop_footer
      %s16 = sadd.s32 1, %s12
    $region7: #{tpu_custom_call.1} parent=1 // loop_footer_branch
      %11 = sbr.rel target = $region3
    $region8: #{tpu_custom_call.1} parent=1 // loop_exit
      _
    %214 = vsyncpa [#allocation3], 1
    %s215 = scalar_lea.sflag [#allocation3], 1
    %216 = vsyncpa %s215, 1

</llo_original>
